<compile_context>
chip_gen: v5e
topology: v5e:2x2
jax: 0.10.0
libtpu: 0.0.40
codegen_flags: <defaults>
</compile_context>

<pallas_src>
import jax
import jax.numpy as jnp
from jax.experimental import pallas as pl
from jax.experimental.pallas import tpu as pltpu


def _focus_conv_kernel(w_ref, b_ref, x_ref, o_ref):
    # w_ref: (Cout, 4C) bf16 (BN scale already folded in), resident across grid
    # b_ref: (Cout, 1)  f32 folded BN bias, resident across grid
    # x_ref: (1, 4C, tm) bf16 input tile (channels-first, spatial in lanes)
    # o_ref: (1, Cout, tm) output tile (directly NCHW-flattened)
    acc = jnp.dot(w_ref[...], x_ref[0], preferred_element_type=jnp.float32)
    y = acc + b_ref[...]                                     # f32 epilogue
    o_ref[0] = (y * jax.nn.sigmoid(y)).astype(o_ref.dtype)   # SiLU, cast at store


def _pick_row_tile(H2, W2, target_tm, prefer_split):
    """Largest legal row-tile rh (output rows per grid step).

    Legal: rh divides H2 (no padding / no post-slice needed) and rh*W2 is a
    multiple of 128 (unmasked lane-dense vst) OR the tile is the full spatial
    extent. prefer_split keeps >= 2 spatial blocks so both v7x TensorCores get
    work when the batch is 1.
    """
    legal = [r for r in range(1, H2 + 1)
             if H2 % r == 0 and ((r * W2) % 128 == 0 or r == H2)]
    if prefer_split:
        split = [r for r in legal if r < H2]
        if split:
            legal = split
    under = [r for r in legal if r * W2 <= target_tm]
    return max(under) if under else min(legal)


def focus_forward(x_nchw, weight, bn_gamma, bn_beta, bn_mean, bn_var,
                  eps=1e-5, tm_target=8192, out_dtype=jnp.bfloat16):
    """x_nchw: (N, C, H, W) float32.
    weight: (Cout, 4C) or (Cout, 4C, 1, 1) 1x1-conv weight, channel order
            matching torch.cat([tl, bl, tr, br], dim=1).
    Returns (N, Cout, H/2, W/2) in `out_dtype` (bf16 by default)."""
    N, C, H, W = x_nchw.shape
    assert H % 2 == 0 and W % 2 == 0
    H2, W2 = H // 2, W // 2
    C4 = 4 * C
    if weight.ndim == 4:
        weight = weight.reshape(weight.shape[0], -1)
    Cout = weight.shape[0]
    M = H2 * W2

    # ---- fold BatchNorm into the conv weight / a per-channel bias
    scale = bn_gamma / jnp.sqrt(bn_var + eps)                  # (Cout,)
    w_folded = (weight * scale[:, None]).astype(jnp.bfloat16)  # (Cout, 4C)
    bias = (bn_beta - bn_mean * scale).astype(jnp.float32).reshape(Cout, 1)

    # ---- space-to-depth via one reshape + transpose (bf16 to halve bytes).
    # Channel order matches torch.cat([tl, bl, tr, br], dim=1):
    # new channel k = dw*2C + dh*C + c.
    xb = x_nchw.astype(jnp.bfloat16)
    x6 = xb.reshape(N, C, H2, 2, W2, 2)                 # n c h2 dh w2 dw
    xs = jnp.transpose(x6, (0, 5, 3, 1, 2, 4))          # n dw dh c h2 w2
    xs = xs.reshape(N, C4, M)                           # (N, 4C, H2*W2)

    # ---- spatial tiling: whole output rows, exact division, lane-dense.
    rh = _pick_row_tile(H2, W2, tm_target, prefer_split=(N == 1 and H2 > 1))
    tm = rh * W2
    num_m = H2 // rh

    # ---- explicit VMEM budget (double-buffered tiles + f32 acc temporaries).
    out_itemsize = jnp.dtype(out_dtype).itemsize
    est = (2 * (C4 * tm * 2 + Cout * tm * out_itemsize)     # in/out double buffers
           + 4 * Cout * tm * 4                              # f32 acc / epilogue temps
           + 2 * (Cout * C4 * 2 + Cout * 4))                # resident weight + bias
    vmem_limit = int(min(max(2 * est, 32 * 1024 * 1024), 48 * 1024 * 1024))

    out = pl.pallas_call(
        _focus_conv_kernel,
        out_shape=jax.ShapeDtypeStruct((N, Cout, M), out_dtype),
        grid_spec=pltpu.PrefetchScalarGridSpec(
            num_scalar_prefetch=0,
            grid=(N, num_m),
            in_specs=[
                pl.BlockSpec((Cout, C4), lambda n, j: (0, 0)),      # weight (resident)
                pl.BlockSpec((Cout, 1), lambda n, j: (0, 0)),       # bias   (resident)
                pl.BlockSpec((1, C4, tm), lambda n, j: (n, 0, j)),  # input tile
            ],
            out_specs=pl.BlockSpec((1, Cout, tm), lambda n, j: (n, 0, j)),
        ),
        compiler_params=pltpu.CompilerParams(
            dimension_semantics=("parallel", "parallel"),
            vmem_limit_bytes=vmem_limit),
    )(w_folded, bias, xs)

    # (N, Cout, M) -> (N, Cout, H2, W2): pure reshape, already NCHW.
    return out.reshape(N, Cout, H2, W2)


def _reference(x_nchw, weight, bn_gamma, bn_beta, bn_mean, bn_var, eps=1e-5):
    # Literal PyTorch semantics (strided slices + concat). Conv operands are
    # quantized to bf16 exactly as the kernel does so the comparison is tight.
    tl = x_nchw[..., ::2, ::2]
    bl = x_nchw[..., 1::2, ::2]
    tr = x_nchw[..., ::2, 1::2]
    br = x_nchw[..., 1::2, 1::2]
    xs = jnp.concatenate([tl, bl, tr, br], axis=1)
    xs = xs.astype(jnp.bfloat16).astype(jnp.float32)
    scale = bn_gamma / jnp.sqrt(bn_var + eps)
    bias = bn_beta - bn_mean * scale
    wq = (weight * scale[:, None]).astype(jnp.bfloat16).astype(jnp.float32)
    y = jnp.einsum('ok,nkhw->nohw', wq, xs) + bias[None, :, None, None]
    return y * jax.nn.sigmoid(y)


if __name__ == "__main__":
    key = jax.random.PRNGKey(0)
    N, C, H, W = 2, 4, 16, 16
    Cout = 32

    k1, k2, k3, k4, k5, k6 = jax.random.split(key, 6)
    x = jax.random.normal(k1, (N, C, H, W), dtype=jnp.float32)
    weight = jax.random.normal(k2, (Cout, 4 * C), dtype=jnp.float32) * 0.1
    bn_gamma = 1.0 + 0.1 * jax.random.normal(k3, (Cout,), dtype=jnp.float32)
    bn_beta = 0.1 * jax.random.normal(k4, (Cout,), dtype=jnp.float32)
    bn_mean = 0.1 * jax.random.normal(k5, (Cout,), dtype=jnp.float32)
    bn_var = jnp.abs(1.0 + 0.1 * jax.random.normal(k6, (Cout,), dtype=jnp.float32))

    out = focus_forward(x, weight, bn_gamma, bn_beta, bn_mean, bn_var)
    out = jax.block_until_ready(out)

    ref = _reference(x, weight, bn_gamma, bn_beta, bn_mean, bn_var)
    assert out.shape == (N, Cout, H // 2, W // 2), out.shape
    assert out.dtype == jnp.bfloat16, out.dtype
    err = jnp.max(jnp.abs(out.astype(jnp.float32) - ref))
    assert err < 2e-2, f"mismatch vs reference, max abs err = {err}"

    print("KERNEL_OK")
</pallas_src>

<mosaic_0001>
module attributes {stable_mosaic.version = 11 : i64} {
  func.func @_focus_conv_kernel(%arg0: i32, %arg1: i32, %arg2: memref<32x16xbf16, #tpu.memory_space<vmem>>, %arg3: memref<32x1xf32, #tpu.memory_space<vmem>>, %arg4: memref<1x16x64xbf16, #tpu.memory_space<vmem>>, %arg5: memref<1x32x64xbf16, #tpu.memory_space<vmem>>) attributes {dimension_semantics = [#tpu.dimension_semantics<parallel>, #tpu.dimension_semantics<parallel>], iteration_bounds = array<i64: 2, 1>, scalar_prefetch = 0 : i64, scratch_operands = 0 : i64, tpu.core_type = #tpu.core_type<tc>, window_params = [{pipeline_mode = #tpu.pipeline_mode<synchronous>, transform_indices = @transform_0, window_bounds = array<i64: 32, 16>}, {pipeline_mode = #tpu.pipeline_mode<synchronous>, transform_indices = @transform_1, window_bounds = array<i64: 32, 1>}, {transform_indices = @transform_2, window_bounds = array<i64: 1, 16, 64>}, {transform_indices = @transform_3, window_bounds = array<i64: 1, 32, 64>}]} {
    %c0 = arith.constant 0 : index
    %c0_0 = arith.constant 0 : index
    %0 = vector.load %arg2[%c0, %c0_0] : memref<32x16xbf16, #tpu.memory_space<vmem>>, vector<32x16xbf16>
    %c0_1 = arith.constant 0 : index
    %c0_2 = arith.constant 0 : index
    %c0_3 = arith.constant 0 : index
    %1 = vector.load %arg4[%c0_1, %c0_2, %c0_3] : memref<1x16x64xbf16, #tpu.memory_space<vmem>>, vector<1x16x64xbf16>
    %2 = vector.shape_cast %1 : vector<1x16x64xbf16> to vector<16x64xbf16>
    %cst = arith.constant dense<0.000000e+00> : vector<32x64xf32>
    %3 = tpu.matmul %0, %2, %cst {dimension_numbers = #tpu.dot_dimension_numbers<[1], [0], [0], [1], [0, 0, 1, 1], [], []>} : vector<32x16xbf16>, vector<16x64xbf16>, vector<32x64xf32> -> vector<32x64xf32>
    %c0_4 = arith.constant 0 : index
    %c0_5 = arith.constant 0 : index
    %4 = vector.load %arg3[%c0_4, %c0_5] : memref<32x1xf32, #tpu.memory_space<vmem>>, vector<32x1xf32>
    %5 = vector.broadcast %4 : vector<32x1xf32> to vector<32x64xf32>
    %6 = arith.addf %3, %5 : vector<32x64xf32>
    %7 = arith.negf %6 : vector<32x64xf32>
    %8 = math.exp %7 : vector<32x64xf32>
    %cst_6 = arith.constant 1.000000e+00 : f32
    %9 = vector.broadcast %cst_6 : f32 to vector<32x64xf32>
    %10 = arith.addf %9, %8 : vector<32x64xf32>
    %11 = arith.divf %9, %10 : vector<32x64xf32>
    %12 = arith.mulf %6, %11 : vector<32x64xf32>
    %13 = arith.truncf %12 : vector<32x64xf32> to vector<32x64xbf16>
    %c0_7 = arith.constant 0 : index
    %c0_8 = arith.constant 0 : index
    %c0_9 = arith.constant 0 : index
    %14 = vector.load %arg5[%c0_7, %c0_8, %c0_9] : memref<1x32x64xbf16, #tpu.memory_space<vmem>>, vector<1x32x64xbf16>
    %15 = vector.shape_cast %14 : vector<1x32x64xbf16> to vector<32x64xbf16>
    %16 = vector.shape_cast %13 : vector<32x64xbf16> to vector<1x32x64xbf16>
    tpu.vector_store %arg5[%c0_7, %c0_8, %c0_9], %16 {strides = array<i32>} : memref<1x32x64xbf16, #tpu.memory_space<vmem>>, vector<1x32x64xbf16>,
    return
  }
  func.func @transform_0(%arg0: i32, %arg1: i32) -> (i32, i32) {
    %c0_i32 = arith.constant 0 : i32
    %c0_i32_0 = arith.constant 0 : i32
    %c0_i32_1 = arith.constant 0 : i32
    return %c0_i32, %c0_i32_0 : i32, i32
  }
  func.func @transform_1(%arg0: i32, %arg1: i32) -> (i32, i32) {
    %c0_i32 = arith.constant 0 : i32
    %c0_i32_0 = arith.constant 0 : i32
    %c0_i32_1 = arith.constant 0 : i32
    return %c0_i32, %c0_i32_0 : i32, i32
  }
  func.func @transform_2(%arg0: i32, %arg1: i32) -> (i32, i32, i32) {
    %c0_i32 = arith.constant 0 : i32
    %c0_i32_0 = arith.constant 0 : i32
    return %arg0, %c0_i32, %arg1 : i32, i32, i32
  }
  func.func @transform_3(%arg0: i32, %arg1: i32) -> (i32, i32, i32) {
    %c0_i32 = arith.constant 0 : i32
    %c0_i32_0 = arith.constant 0 : i32
    return %arg0, %c0_i32, %arg1 : i32, i32, i32
  }
}

</mosaic_0001>

<llo_original>
// kernel: tpu_custom_call.1
$region0: #{tpu_custom_call.1}
  #allocation0 [shape = 'u32[]', space=smem, size = 0x4, offset = 0x4, fixed_abs, tag = 'smem constant byte address 0x4 - core index']
  #allocation1 [shape = 'u32[72,128]{1,0:T(1,128)}', space=vmem, size = 0x9000, scoped, tag = 'internal scratch']
  %s0 = inlined_call_operand.vmem [shape: bf16[32,16], index: 0, kind: input, shape index: {}]
  %s1 = inlined_call_operand.vmem [shape: f32[32,1], index: 1, kind: input, shape index: {}]
  %s2 = inlined_call_operand.vmem [shape: bf16[2,16,64], index: 2, kind: input, shape index: {}]
  %s3 = inlined_call_operand.hbm [shape: bf16[2,32,64], index: 3, kind: output, shape index: {}]
  %s4 = sld [smem:[#allocation0]]
  $region45: #{tpu_custom_call.1} parent=0
    _
  %s6 = ssub.s32 1, %s4
  %s7 = scalar_select 0, %s6, %s4
  $region1: #{tpu_custom_call.1} parent=0
    #allocation2 [shape = 'u8[16384]{0}', space=vmem, size = 0x4000, scoped, tag = 'output window, operand 0']
    #allocation3 [shape = 's32[2]{0}', space=sflag, size = 0x8, scoped, tag = 'scoped memory for tpu_custom_call.1']
    %8 = vsyncpa [#allocation3], 0
    %s9 = scalar_lea.sflag [#allocation3], 1
    %10 = vsyncpa %s9, 0
    loop: start=0, step=1, limit=4
    $region2: #{tpu_custom_call.1} parent=1 // loop_pre_header
      _
    $region3: #{tpu_custom_call.1} parent=1 // loop_header
      %s12 = sphi 0, %s16
      %p13 = scmp.ge.s32.totalorder %s12, 4
      %s19 = sphi 0, %s31
      %s20 = sphi 0, %s27
      %s21 = sphi 0, %s19
      %s22 = sphi 0, %s20
      %s23 = sphi 0, %s21
      %s24 = sphi 0, %s22
      %s32 = sphi 0, %s32
      %s34 = sphi 0, %s32
      %s35 = sphi 0, %s34
      %s49 = sphi 0, %s35
      %s53 = sphi 0, %s53
      %s55 = sphi 0, %s53
      %s56 = sphi 0, %s55
      %s70 = sphi 0, %s56
      %s78 = sphi 0, %s80
      %s81 = sphi 0, %s78
      %s82 = sphi 0, %s81
      %s98 = sphi 0, %s82
      %s106 = sphi 0, %s108
      %s109 = sphi 0, %s106
      %s110 = sphi 0, %s109
      %s126 = sphi 0, %s110
    $region4: #{tpu_custom_call.1} parent=1 // loop_header_branch
      %15 = sbr.rel (%p13) target = $region8
    $region5: #{tpu_custom_call.1} parent=1 // loop_body
      %s17 = ssub.s32 %s12, 1
      %s18 = ssub.s32 %s12, 2
      %s25 = sadd.s32 1, %s20
      %p26 = scmp.ge.s32.totalorder %s25, 1
      %s27 = scalar_select %p26, 0, %s25
      %s28 = sadd.s32 1, %s19
      %s29 = scalar_select %p26, %s28, %s19
      %p30 = scmp.ge.s32.totalorder %s29, 2
      %s31 = scalar_select %p30, 0, %s29
      %s33 = sadd.s32 %s32, 1
      %p36 = scmp.eq.s32.totalorder %s12, 1
      %p37 = scmp.ne.s32.totalorder %s32, %s34
      %p38 = scmp.eq.s32.totalorder %s12, 0
      %p39 = por %p37, %p38
      %p40 = scmp.ne.s32.totalorder %s32, %s34
      %p41 = scmp.eq.s32.totalorder %s17, 1
      %p42 = por %p40, %p41
      %p43 = scmp.ne.s32.totalorder %s34, %s35
      %p44 = scmp.eq.s32.totalorder %s17, 0
      %p45 = por %p43, %p44
      %p46 = scmp.ne.s32.totalorder %s34, %s35
      %p47 = scmp.eq.s32.totalorder %s18, 1
      %p48 = por %p46, %p47
      %p50 = scmp.ne.s32.totalorder %s35, %s49
      %p51 = scmp.eq.s32.totalorder %s18, 0
      %p52 = por %p50, %p51
      %s54 = sadd.s32 %s53, 1
      %p57 = scmp.eq.s32.totalorder %s12, 1
      %p58 = scmp.ne.s32.totalorder %s53, %s55
      %p59 = scmp.eq.s32.totalorder %s12, 0
      %p60 = por %p58, %p59
      %p61 = scmp.ne.s32.totalorder %s53, %s55
      %p62 = scmp.eq.s32.totalorder %s17, 1
      %p63 = por %p61, %p62
      %p64 = scmp.ne.s32.totalorder %s55, %s56
      %p65 = scmp.eq.s32.totalorder %s17, 0
      %p66 = por %p64, %p65
      %p67 = scmp.ne.s32.totalorder %s55, %s56
      %p68 = scmp.eq.s32.totalorder %s18, 1
      %p69 = por %p67, %p68
      %p71 = scmp.ne.s32.totalorder %s56, %s70
      %p72 = scmp.eq.s32.totalorder %s18, 0
      %p73 = por %p71, %p72
      %s74 = ssub.s32 %s19, %s31
      %s75 = ssub.s32 %s20, %s27
      %s76 = sor.u32 %s74, %s75
      %p77 = scmp.eq.s32.totalorder %s76, 0
      %s79 = sadd.s32 %s78, 1
      %s80 = scalar_select %p77, %s78, %s79
      %p83 = pneg %p77
      %p84 = scmp.eq.s32.totalorder %s12, 1
      %p85 = por %p83, %p84
      %p86 = scmp.ne.s32.totalorder %s78, %s81
      %p87 = scmp.eq.s32.totalorder %s12, 0
      %p88 = por %p86, %p87
      %p89 = scmp.ne.s32.totalorder %s78, %s81
      %p90 = scmp.eq.s32.totalorder %s17, 1
      %p91 = por %p89, %p90
      %p92 = scmp.ne.s32.totalorder %s81, %s82
      %p93 = scmp.eq.s32.totalorder %s17, 0
      %p94 = por %p92, %p93
      %p95 = scmp.ne.s32.totalorder %s81, %s82
      %p96 = scmp.eq.s32.totalorder %s18, 1
      %p97 = por %p95, %p96
      %p99 = scmp.ne.s32.totalorder %s82, %s98
      %p100 = scmp.eq.s32.totalorder %s18, 0
      %p101 = por %p99, %p100
      %s102 = ssub.s32 %s19, %s31
      %s103 = ssub.s32 %s20, %s27
      %s104 = sor.u32 %s102, %s103
      %p105 = scmp.eq.s32.totalorder %s104, 0
      %s107 = sadd.s32 %s106, 1
      %s108 = scalar_select %p105, %s106, %s107
      %p111 = pneg %p105
      %p112 = scmp.eq.s32.totalorder %s12, 1
      %p113 = por %p111, %p112
      %p114 = scmp.ne.s32.totalorder %s106, %s109
      %p115 = scmp.eq.s32.totalorder %s12, 0
      %p116 = por %p114, %p115
      %p117 = scmp.ne.s32.totalorder %s106, %s109
      %p118 = scmp.eq.s32.totalorder %s17, 1
      %p119 = por %p117, %p118
      %p120 = scmp.ne.s32.totalorder %s109, %s110
      %p121 = scmp.eq.s32.totalorder %s17, 0
      %p122 = por %p120, %p121
      %p123 = scmp.ne.s32.totalorder %s109, %s110
      %p124 = scmp.eq.s32.totalorder %s18, 1
      %p125 = por %p123, %p124
      %p127 = scmp.ne.s32.totalorder %s110, %s126
      %p128 = scmp.eq.s32.totalorder %s18, 0
      %p129 = por %p127, %p128
      %p130 = scmp.le.s32.totalorder 1, %s12
      %p131 = scmp.lt.s32.totalorder %s12, 3
      %p132 = pnand %p130, %p131
      %p133 = pneg %p132
      // Predicated region
      $region9: #{tpu_custom_call.1} parent=5 // pred_check
        _
      $region10: #{tpu_custom_call.1} parent=5 // pred_check_branch
        %135 = sbr.rel (%p132) target = $region12
      $region11: #{tpu_custom_call.1} parent=5 // pred_region
        %s136 = ssub.s32 %s12, 1
        // Predicated region
        $region13: #{tpu_custom_call.1} parent=11 // pred_check
          %p137 = pneg %p45
        $region14: #{tpu_custom_call.1} parent=11 // pred_check_branch
          %139 = sbr.rel (%p137) target = $region16
        $region15: #{tpu_custom_call.1} parent=11 // pred_region
          _
        $region16: #{tpu_custom_call.1} parent=11 // pred_fallthru
          _
        // Predicated region
        $region17: #{tpu_custom_call.1} parent=11 // pred_check
          %p140 = pneg %p66
        $region18: #{tpu_custom_call.1} parent=11 // pred_check_branch
          %142 = sbr.rel (%p140) target = $region20
        $region19: #{tpu_custom_call.1} parent=11 // pred_region
          _
        $region20: #{tpu_custom_call.1} parent=11 // pred_fallthru
          _
      $region12: #{tpu_custom_call.1} parent=5 // pred_fallthru
        _
      %p143 = scmp.lt.s32.totalorder %s12, 2
      // Predicated region
      $region21: #{tpu_custom_call.1} parent=5 // pred_check
        %p144 = pneg %p143
      $region22: #{tpu_custom_call.1} parent=5 // pred_check_branch
        %146 = sbr.rel (%p144) target = $region24
      $region23: #{tpu_custom_call.1} parent=5 // pred_region
        // Predicated region
        $region25: #{tpu_custom_call.1} parent=23 // pred_check
          %p147 = pneg %p88
        $region26: #{tpu_custom_call.1} parent=23 // pred_check_branch
          %149 = sbr.rel (%p147) target = $region28
        $region27: #{tpu_custom_call.1} parent=23 // pred_region
          %p150 = scmp.lt.s32.totalorder %s19, 1
          %s151 = scalar_select %p150, %s19, 1
          %p152 = scmp.lt.s32.totalorder %s20, 0
          %s153 = scalar_select %p152, %s20, 0
          %s154 = smul.addr %s151, 2
          %s155 = sadd.s32 %s153, %s154
          %s156 = smul.addr %s155, 4
          %s157 = scalar_lea.vmem %s2, %s156
        $region28: #{tpu_custom_call.1} parent=23 // pred_fallthru
          _
      $region24: #{tpu_custom_call.1} parent=5 // pred_fallthru
        _
      %p158 = scmp.le.s32.totalorder 1, %s12
      %p159 = scmp.lt.s32.totalorder %s12, 3
      %p160 = pnand %p158, %p159
      %p161 = pneg %p160
      // Predicated region
      $region29: #{tpu_custom_call.1} parent=5 // pred_check
        _
      $region30: #{tpu_custom_call.1} parent=5 // pred_check_branch
        %163 = sbr.rel (%p160) target = $region32
      $region31: #{tpu_custom_call.1} parent=5 // pred_region
        %s164 = ssub.s32 %s12, 1
        %p165 = pneg %p45
        %p166 = pneg %p42
        %p167 = pneg %p66
        %p168 = pneg %p63
        %p169 = scmp.lt.s32.totalorder %s21, 1
        %s170 = scalar_select %p169, %s21, 1
        %p171 = scmp.lt.s32.totalorder %s22, 0
        %s172 = scalar_select %p171, %s22, 0
        %s173 = smul.addr %s170, 2
        %s174 = sadd.s32 %s172, %s173
        %s175 = smul.addr %s174, 4
        %s176 = scalar_lea.vmem %s2, %s175
        %p177 = pneg %p94
        %p178 = pneg %p91
        %p179 = pneg %p122
        %p180 = pneg %p119
        %s181 = sand.u32 %s109, 1
        %s182 = scalar_lea.sflag [#allocation3], %s181
        %s183 = sand.u32 %s109, 1
        %s184 = smul.addr %s183, 16
        %s185 = scalar_lea.vmem [#allocation2], %s184
        %p186 = scmp.lt.s32.totalorder %s21, 1
        %s187 = scalar_select %p186, %s21, 1
        %p188 = scmp.lt.s32.totalorder %s22, 0
        %s189 = scalar_select %p188, %s22, 0
        %s190 = smul.addr %s187, 2
        %s191 = sadd.s32 %s189, %s190
        %s192 = smul.addr %s191, 4
        %s193 = scalar_lea.vmem %s2, %s192
        %v195 = vld [vmem:[%s0] sm:$0xf]
        %v196 = vld [vmem:[%s0 + $0x4] sm:$0xf]
        %v197 = vld [vmem:[%s0 + $0x8] sm:$0xf]
        %v198 = vld [vmem:[%s0 + $0xc] sm:$0xf]
        %v199 = vld [vmem:[%s193] sm:$0xf]
        %v200 = vld [vmem:[%s193 + $0x4] sm:$0xf]
        %v201 = vld [vmem:[%s1] sm:$0xff]
        %v202 = vld [vmem:[%s1 + $0x8] sm:$0xff]
        %v203 = vld [vmem:[%s1 + $0x10] sm:$0xff]
        %v204 = vld [vmem:[%s1 + $0x18] sm:$0xff]
        %206 = vset.pattern.permute.xlu0 0
        %207 = vperm.xlu0 %206, %v201
        %v208 = vpop.permute.xlu0 %207
        %211 = vset.pattern.permute.xlu0 0
        %212 = vperm.xlu0 %211, %v202
        %v213 = vpop.permute.xlu0 %212
        %216 = vset.pattern.permute.xlu0 0
        %217 = vperm.xlu0 %216, %v203
        %v218 = vpop.permute.xlu0 %217
        %221 = vset.pattern.permute.xlu0 0
        %222 = vperm.xlu0 %221, %v204
        %v223 = vpop.permute.xlu0 %222
        %v229 = vunpack.c.l.b16 %v195
        %v230 = vunpack.c.l.b16 %v196
        %v231 = vunpack.c.l.b16 %v197
        %v232 = vunpack.c.l.b16 %v198
        %v233 = vpack.c.b16 %v230, %v229
        %v234 = vpack.c.b16 %v232, %v231
        %v237 = vunpack.c.l.b16 %v199
        %v238 = vunpack.c.l.b16 %v200
        %v239 = vpack.c.b16 %v238, %v237
        %vm241 = vcmask 130048
        %v243 = vsel %vm241, %v233, 0
        %v246 = vsel %vm241, %v234, 0
        %248 = vmatpush.bf16.msra.mxu0 0
        %249 = vmatpush.bf16.msra.mxu0 0
        %250 = vmatpush.bf16.msra.mxu0 0
        %251 = vmatpush.bf16.msra.mxu0 0
        %252 = vmatpush.bf16.msra.mxu0 0
        %253 = vmatpush.bf16.msra.mxu0 0
        %254 = vmatpush.bf16.msra.mxu0 0
        %255 = vmatpush.bf16.msra.mxu0 %v239
        %256 = vmatmul.bf16.gmra.mxu0 %v243
        %v257 = vpop.f32.mrf.mxu0
        %v258 = vadd.f32 %v208, %v257
        %v259 = vpop.f32.mrf.mxu0
        %v260 = vadd.f32 %v213, %v259
        %261 = vmatmul.bf16.gmra.mxu0 %v246
        %v262 = vpop.f32.mrf.mxu0
        %v263 = vadd.f32 %v218, %v262
        %v264 = vpop.f32.mrf.mxu0
        %v265 = vadd.f32 %v223, %v264
        %266 = vdwg.mxu0
        %v267 = vxor.u32 %v258, 2147483648
        %v268 = vxor.u32 %v260, 2147483648
        %v269 = vxor.u32 %v263, 2147483648
        %v270 = vxor.u32 %v265, 2147483648
        %v271 = vmul.f32 %v267, 1.442695
        %v272 = vpow.pop %v271
        %v273 = vmul.f32 %v268, 1.442695
        %v274 = vpow.pop %v273
        %v275 = vmul.f32 %v269, 1.442695
        %v276 = vpow.pop %v275
        %v277 = vmul.f32 %v270, 1.442695
        %v278 = vpow.pop %v277
        %v279 = vadd.f32 %v272, 1.0
        %v280 = vadd.f32 %v274, 1.0
        %v281 = vadd.f32 %v276, 1.0
        %v282 = vadd.f32 %v278, 1.0
        %v283 = vrcp.pop %v279
        %v284 = vmul.f32 %v279, %v283
        %v285 = vsub.f32 1.0, %v284
        %v286 = vmul.f32 %v283, %v285
        %v287 = vadd.f32 %v283, %v286
        %vm288 = vweird.f32 %v279
        %vm289 = vweird.f32 %v283
        %vm290 = vmor %vm288, %vm289
        %v291 = vsel %vm290, %v283, %v287
        %v292 = vand.u32 2147483647, %v279
        %vm293 = vcmp.eq.f32.partialorder %v292, 8.507059e+37
        %v294 = vand.u32 %v279, 2147483648
        %v295 = vor.u32 1.1754944e-38, %v294
        %v296 = vsel %vm293, %v295, %v291
        %v297 = vmul.f32 1.0, %v296
        %v298 = vrcp.pop %v280
        %v299 = vmul.f32 %v280, %v298
        %v300 = vsub.f32 1.0, %v299
        %v301 = vmul.f32 %v298, %v300
        %v302 = vadd.f32 %v298, %v301
        %vm303 = vweird.f32 %v280
        %vm304 = vweird.f32 %v298
        %vm305 = vmor %vm303, %vm304
        %v306 = vsel %vm305, %v298, %v302
        %v307 = vand.u32 2147483647, %v280
        %vm308 = vcmp.eq.f32.partialorder %v307, 8.507059e+37
        %v309 = vand.u32 %v280, 2147483648
        %v310 = vor.u32 1.1754944e-38, %v309
        %v311 = vsel %vm308, %v310, %v306
        %v312 = vmul.f32 1.0, %v311
        %v313 = vrcp.pop %v281
        %v314 = vmul.f32 %v281, %v313
        %v315 = vsub.f32 1.0, %v314
        %v316 = vmul.f32 %v313, %v315
        %v317 = vadd.f32 %v313, %v316
        %vm318 = vweird.f32 %v281
        %vm319 = vweird.f32 %v313
        %vm320 = vmor %vm318, %vm319
        %v321 = vsel %vm320, %v313, %v317
        %v322 = vand.u32 2147483647, %v281
        %vm323 = vcmp.eq.f32.partialorder %v322, 8.507059e+37
        %v324 = vand.u32 %v281, 2147483648
        %v325 = vor.u32 1.1754944e-38, %v324
        %v326 = vsel %vm323, %v325, %v321
        %v327 = vmul.f32 1.0, %v326
        %v328 = vrcp.pop %v282
        %v329 = vmul.f32 %v282, %v328
        %v330 = vsub.f32 1.0, %v329
        %v331 = vmul.f32 %v328, %v330
        %v332 = vadd.f32 %v328, %v331
        %vm333 = vweird.f32 %v282
        %vm334 = vweird.f32 %v328
        %vm335 = vmor %vm333, %vm334
        %v336 = vsel %vm335, %v328, %v332
        %v337 = vand.u32 2147483647, %v282
        %vm338 = vcmp.eq.f32.partialorder %v337, 8.507059e+37
        %v339 = vand.u32 %v282, 2147483648
        %v340 = vor.u32 1.1754944e-38, %v339
        %v341 = vsel %vm338, %v340, %v336
        %v342 = vmul.f32 1.0, %v341
        %v343 = vmul.f32 %v258, %v297
        %v344 = vmul.f32 %v260, %v312
        %v345 = vmul.f32 %v263, %v327
        %v346 = vmul.f32 %v265, %v342
        %v347 = vpack.c.bf16 %v343, %v343
        %v348 = vpack.c.bf16 %v344, %v344
        %v349 = vpack.c.bf16 %v345, %v345
        %v350 = vpack.c.bf16 %v346, %v346
        %vm351 = vcmask 519168
        %352 = vst.msk [vmem:[%s185] sm:$0xf] %vm351, %v347
        %353 = vst.msk [vmem:[%s185 + $0x4] sm:$0xf] %vm351, %v348
        %354 = vst.msk [vmem:[%s185 + $0x8] sm:$0xf] %vm351, %v349
        %355 = vst.msk [vmem:[%s185 + $0xc] sm:$0xf] %vm351, %v350
        %s356 = sand.u32 %s109, 1
        %s357 = scalar_lea.sflag [#allocation3], %s356
        %s358 = sand.u32 %s109, 1
        %s359 = smul.addr %s358, 16
        %s360 = scalar_lea.vmem [#allocation2], %s359
        // Predicated region
        $region33: #{tpu_custom_call.1} parent=31 // pred_check
          %p361 = pneg %p119
        $region34: #{tpu_custom_call.1} parent=31 // pred_check_branch
          %363 = sbr.rel (%p361) target = $region36
        $region35: #{tpu_custom_call.1} parent=31 // pred_region
          %365 = vsyncadd %s357, 0
          %s366 = smul.addr %s21, 4
          %s367 = sadd.s32 %s22, %s366
          %s368 = smul.addr %s367, 4
          %s369 = scalar_lea.hbm %s3, %s368
          %s370 = sshll.u32 %s360, 4
          %s371 = int_to_ptr.vmem [resolvable:$true] %s370
          %s372 = sshll.u32 %s369, 4
          %s373 = int_to_ptr.hbm [resolvable:$true] %s372
          %378 = dma.vmem_to_hbm [thread:$0]  %s371, 256, %s373, %s357, 64, 64, 4
        $region36: #{tpu_custom_call.1} parent=31 // pred_fallthru
          _
      $region32: #{tpu_custom_call.1} parent=5 // pred_fallthru
        _
      %p379 = scmp.le.s32.totalorder 2, %s12
      // Predicated region
      $region37: #{tpu_custom_call.1} parent=5 // pred_check
        %p380 = pneg %p379
      $region38: #{tpu_custom_call.1} parent=5 // pred_check_branch
        %382 = sbr.rel (%p380) target = $region40
      $region39: #{tpu_custom_call.1} parent=5 // pred_region
        %s383 = ssub.s32 %s12, 2
        // Predicated region
        $region41: #{tpu_custom_call.1} parent=39 // pred_check
          %p384 = pneg %p125
        $region42: #{tpu_custom_call.1} parent=39 // pred_check_branch
          %386 = sbr.rel (%p384) target = $region44
        $region43: #{tpu_custom_call.1} parent=39 // pred_region
          %s387 = sand.u32 %s110, 1
          %s388 = scalar_lea.sflag [#allocation3], %s387
          %s389 = sand.u32 %s110, 1
          %s390 = smul.addr %s389, 16
          %s391 = scalar_lea.vmem [#allocation2], %s390
          %393 = dma.done %s388, 256
        $region44: #{tpu_custom_call.1} parent=39 // pred_fallthru
          _
      $region40: #{tpu_custom_call.1} parent=5 // pred_fallthru
        _
    $region6: #{tpu_custom_call.1} parent=1 // loop_footer
      %s16 = sadd.s32 1, %s12
    $region7: #{tpu_custom_call.1} parent=1 // loop_footer_branch
      %11 = sbr.rel target = $region3
    $region8: #{tpu_custom_call.1} parent=1 // loop_exit
      _
    %394 = vsyncpa [#allocation3], 1
    %s395 = scalar_lea.sflag [#allocation3], 1
    %396 = vsyncpa %s395, 1

</llo_original>
